<compile_context>
chip_gen: v7x
topology: tpu7x:2x2x1
jax: 0.10.0
libtpu: 0.0.40
codegen_flags: <defaults>
</compile_context>

<pallas_src>
import jax
import jax.numpy as jnp
from jax.experimental import pallas as pl
from jax.experimental.pallas import tpu as pltpu


def _round_up(n, m):
    return ((n + m - 1) // m) * m


def _mlp_kernel(x_ref,
                w1_ref, b1_ref,
                w2_ref, b2_ref,
                w3_ref, b3_ref,
                w4_ref, b4_ref,
                o_ref):
    cdt = w1_ref.dtype  # MXU compute dtype (bf16)

    # Layer 1: (bt, 32) x (32, 256)
    h = x_ref[...].astype(cdt)
    h = jnp.dot(h, w1_ref[...], preferred_element_type=jnp.float32) + b1_ref[...]
    h = jnp.maximum(h, 0.0).astype(cdt)

    # Layer 2: (bt, 256) x (256, 128)
    h = jnp.dot(h, w2_ref[...], preferred_element_type=jnp.float32) + b2_ref[...]
    h = jnp.maximum(h, 0.0).astype(cdt)

    # Layer 3: (bt, 128) x (128, 64)
    h = jnp.dot(h, w3_ref[...], preferred_element_type=jnp.float32) + b3_ref[...]
    h = jnp.maximum(h, 0.0).astype(cdt)

    # Layer 4 (no ReLU): (bt, 64) x (64, 64)
    out = jnp.dot(h, w4_ref[...], preferred_element_type=jnp.float32) + b4_ref[...]
    o_ref[...] = out.astype(o_ref.dtype)


def prepare_params(params, compute_dtype=jnp.bfloat16):
    """One-time packing: cast weights to the MXU compute dtype, biases to f32.

    Hoisted out of the per-call forward so no pad/convert XLA ops run on every
    inference call.
    """
    prepared = []
    for w, b in params:
        prepared.append((jnp.asarray(w, compute_dtype),
                         jnp.asarray(b, jnp.float32).reshape(1, -1)))
    return tuple(prepared)


def tokenizer_mlp_forward(x, prepared_params, *, batch_tile=1024):
    """x: (B, input_dim) float32.  prepared_params: output of prepare_params."""
    B, in_dim = x.shape
    assert prepared_params[0][0].shape[0] == in_dim
    out_dim = prepared_params[-1][0].shape[1]

    # ---- batch tiling ------------------------------------------------------
    # x stays float32 in HBM/VMEM -> sublane multiple is 8.
    sub = 8
    Bp0 = _round_up(B, sub)
    bt = max(sub, min(batch_tile, Bp0))
    # Keep >= 2 grid steps whenever possible so the "parallel" batch axis can
    # shard across v7x's 2 TensorCores (harmless on 1-TC v5e/v6e).
    if Bp0 >= 2 * sub:
        bt = min(bt, _round_up(pl.cdiv(Bp0, 2), sub))
    Bp = _round_up(B, bt)
    xp = x if Bp == B else jnp.pad(x, ((0, Bp - B), (0, 0)))

    flat = []
    for w, b in prepared_params:
        flat.append(w)
        flat.append(b)

    # Weights/biases: full array as one block with a constant index -> DMA'd
    # once, VMEM-resident across all grid steps.
    def resident(arr):
        return pl.BlockSpec(arr.shape, lambda i: (0, 0))

    in_specs = [pl.BlockSpec((bt, in_dim), lambda i: (i, 0))]
    in_specs += [resident(a) for a in flat]
    out_spec = pl.BlockSpec((bt, out_dim), lambda i: (i, 0))

    out_padded = pl.pallas_call(
        _mlp_kernel,
        out_shape=jax.ShapeDtypeStruct((Bp, out_dim), jnp.float32),
        grid_spec=pltpu.PrefetchScalarGridSpec(
            num_scalar_prefetch=0,
            grid=(Bp // bt,),
            in_specs=in_specs,
            out_specs=out_spec,
        ),
        compiler_params=pltpu.CompilerParams(
            dimension_semantics=("parallel",),
        ),
    )(xp, *flat)

    out = out_padded if Bp == B else out_padded[:B]
    return out.astype(x.dtype)


def init_params(key, input_dim, output_dim=64, hidden_dims=(256, 128, 64)):
    """Deterministic synthetic init (Kaiming-uniform-like, as torch.nn.Linear)."""
    dims = [input_dim] + list(hidden_dims) + [output_dim]
    params = []
    for i in range(len(dims) - 1):
        fan_in, fan_out = dims[i], dims[i + 1]
        key, kw, kb = jax.random.split(key, 3)
        bound = 1.0 / jnp.sqrt(jnp.float32(fan_in))
        w = jax.random.uniform(kw, (fan_in, fan_out), jnp.float32, -bound, bound)
        b = jax.random.uniform(kb, (1, fan_out), jnp.float32, -bound, bound)
        params.append((w, b))
    return params


def reference_forward(x, params, compute_dtype=jnp.bfloat16):
    """Pure-JAX reference mirroring the kernel's mixed-precision scheme."""
    h = x.astype(compute_dtype)
    n = len(params)
    for i, (w, b) in enumerate(params):
        h = jnp.dot(h, w.astype(compute_dtype),
                    preferred_element_type=jnp.float32) + b.astype(jnp.float32)
        if i < n - 1:
            h = jnp.maximum(h, 0.0).astype(compute_dtype)
    return h.astype(x.dtype)


if __name__ == "__main__":
    key = jax.random.PRNGKey(0)
    k_params, k_x = jax.random.split(key)

    input_dim = 32
    batch = 50  # deliberately ragged: exercises batch padding + 2-step grid

    params = init_params(k_params, input_dim=input_dim, output_dim=64,
                         hidden_dims=(256, 128, 64))
    prepared = prepare_params(params)  # one-time weight pack/cast
    x = jax.random.normal(k_x, (batch, input_dim), jnp.float32)

    out = tokenizer_mlp_forward(x, prepared)
    out = jax.block_until_ready(out)

    ref = reference_forward(x, params)
    assert out.shape == (batch, 64), out.shape
    max_err = jnp.max(jnp.abs(out - ref))
    assert jnp.allclose(out, ref, atol=2e-3, rtol=2e-3), f"max abs err {max_err}"

    print("KERNEL_OK")
</pallas_src>

<mosaic_0001>
module attributes {stable_mosaic.version = 11 : i64} {
  func.func @_mlp_kernel(%arg0: i32, %arg1: memref<32x32xf32, #tpu.memory_space<vmem>>, %arg2: memref<32x256xbf16, #tpu.memory_space<vmem>>, %arg3: memref<1x256xf32, #tpu.memory_space<vmem>>, %arg4: memref<256x128xbf16, #tpu.memory_space<vmem>>, %arg5: memref<1x128xf32, #tpu.memory_space<vmem>>, %arg6: memref<128x64xbf16, #tpu.memory_space<vmem>>, %arg7: memref<1x64xf32, #tpu.memory_space<vmem>>, %arg8: memref<64x64xbf16, #tpu.memory_space<vmem>>, %arg9: memref<1x64xf32, #tpu.memory_space<vmem>>, %arg10: memref<32x64xf32, #tpu.memory_space<vmem>>) attributes {dimension_semantics = [#tpu.dimension_semantics<parallel>], iteration_bounds = array<i64: 2>, scalar_prefetch = 0 : i64, scratch_operands = 0 : i64, tpu.core_type = #tpu.core_type<tc>, window_params = [{transform_indices = @transform_0, window_bounds = array<i64: 32, 32>}, {pipeline_mode = #tpu.pipeline_mode<synchronous>, transform_indices = @transform_1, window_bounds = array<i64: 32, 256>}, {pipeline_mode = #tpu.pipeline_mode<synchronous>, transform_indices = @transform_2, window_bounds = array<i64: 1, 256>}, {pipeline_mode = #tpu.pipeline_mode<synchronous>, transform_indices = @transform_3, window_bounds = array<i64: 256, 128>}, {pipeline_mode = #tpu.pipeline_mode<synchronous>, transform_indices = @transform_4, window_bounds = array<i64: 1, 128>}, {pipeline_mode = #tpu.pipeline_mode<synchronous>, transform_indices = @transform_5, window_bounds = array<i64: 128, 64>}, {pipeline_mode = #tpu.pipeline_mode<synchronous>, transform_indices = @transform_6, window_bounds = array<i64: 1, 64>}, {pipeline_mode = #tpu.pipeline_mode<synchronous>, transform_indices = @transform_7, window_bounds = array<i64: 64, 64>}, {pipeline_mode = #tpu.pipeline_mode<synchronous>, transform_indices = @transform_8, window_bounds = array<i64: 1, 64>}, {transform_indices = @transform_9, window_bounds = array<i64: 32, 64>}]} {
    %c0 = arith.constant 0 : index
    %c0_0 = arith.constant 0 : index
    %0 = vector.load %arg1[%c0, %c0_0] : memref<32x32xf32, #tpu.memory_space<vmem>>, vector<32x32xf32>
    %1 = arith.truncf %0 : vector<32x32xf32> to vector<32x32xbf16>
    %c0_1 = arith.constant 0 : index
    %c0_2 = arith.constant 0 : index
    %2 = vector.load %arg2[%c0_1, %c0_2] : memref<32x256xbf16, #tpu.memory_space<vmem>>, vector<32x256xbf16>
    %cst = arith.constant dense<0.000000e+00> : vector<32x256xf32>
    %3 = tpu.matmul %1, %2, %cst {dimension_numbers = #tpu.dot_dimension_numbers<[1], [0], [0], [1], [0, 0, 1, 1], [], []>} : vector<32x32xbf16>, vector<32x256xbf16>, vector<32x256xf32> -> vector<32x256xf32>
    %c0_3 = arith.constant 0 : index
    %c0_4 = arith.constant 0 : index
    %4 = vector.load %arg3[%c0_3, %c0_4] : memref<1x256xf32, #tpu.memory_space<vmem>>, vector<1x256xf32>
    %5 = vector.broadcast %4 : vector<1x256xf32> to vector<32x256xf32>
    %6 = arith.addf %3, %5 : vector<32x256xf32>
    %cst_5 = arith.constant 0.000000e+00 : f32
    %7 = vector.broadcast %cst_5 : f32 to vector<32x256xf32>
    %8 = arith.maximumf %6, %7 : vector<32x256xf32>
    %9 = arith.truncf %8 : vector<32x256xf32> to vector<32x256xbf16>
    %c0_6 = arith.constant 0 : index
    %c0_7 = arith.constant 0 : index
    %10 = vector.load %arg4[%c0_6, %c0_7] : memref<256x128xbf16, #tpu.memory_space<vmem>>, vector<256x128xbf16>
    %cst_8 = arith.constant dense<0.000000e+00> : vector<32x128xf32>
    %11 = tpu.matmul %9, %10, %cst_8 {dimension_numbers = #tpu.dot_dimension_numbers<[1], [0], [0], [1], [0, 0, 1, 1], [], []>} : vector<32x256xbf16>, vector<256x128xbf16>, vector<32x128xf32> -> vector<32x128xf32>
    %c0_9 = arith.constant 0 : index
    %c0_10 = arith.constant 0 : index
    %12 = vector.load %arg5[%c0_9, %c0_10] : memref<1x128xf32, #tpu.memory_space<vmem>>, vector<1x128xf32>
    %13 = vector.broadcast %12 : vector<1x128xf32> to vector<32x128xf32>
    %14 = arith.addf %11, %13 : vector<32x128xf32>
    %cst_11 = arith.constant 0.000000e+00 : f32
    %15 = vector.broadcast %cst_11 : f32 to vector<32x128xf32>
    %16 = arith.maximumf %14, %15 : vector<32x128xf32>
    %17 = arith.truncf %16 : vector<32x128xf32> to vector<32x128xbf16>
    %c0_12 = arith.constant 0 : index
    %c0_13 = arith.constant 0 : index
    %18 = vector.load %arg6[%c0_12, %c0_13] : memref<128x64xbf16, #tpu.memory_space<vmem>>, vector<128x64xbf16>
    %cst_14 = arith.constant dense<0.000000e+00> : vector<32x64xf32>
    %19 = tpu.matmul %17, %18, %cst_14 {dimension_numbers = #tpu.dot_dimension_numbers<[1], [0], [0], [1], [0, 0, 1, 1], [], []>} : vector<32x128xbf16>, vector<128x64xbf16>, vector<32x64xf32> -> vector<32x64xf32>
    %c0_15 = arith.constant 0 : index
    %c0_16 = arith.constant 0 : index
    %20 = vector.load %arg7[%c0_15, %c0_16] : memref<1x64xf32, #tpu.memory_space<vmem>>, vector<1x64xf32>
    %21 = vector.broadcast %20 : vector<1x64xf32> to vector<32x64xf32>
    %22 = arith.addf %19, %21 : vector<32x64xf32>
    %cst_17 = arith.constant 0.000000e+00 : f32
    %23 = vector.broadcast %cst_17 : f32 to vector<32x64xf32>
    %24 = arith.maximumf %22, %23 : vector<32x64xf32>
    %25 = arith.truncf %24 : vector<32x64xf32> to vector<32x64xbf16>
    %c0_18 = arith.constant 0 : index
    %c0_19 = arith.constant 0 : index
    %26 = vector.load %arg8[%c0_18, %c0_19] : memref<64x64xbf16, #tpu.memory_space<vmem>>, vector<64x64xbf16>
    %cst_20 = arith.constant dense<0.000000e+00> : vector<32x64xf32>
    %27 = tpu.matmul %25, %26, %cst_20 {dimension_numbers = #tpu.dot_dimension_numbers<[1], [0], [0], [1], [0, 0, 1, 1], [], []>} : vector<32x64xbf16>, vector<64x64xbf16>, vector<32x64xf32> -> vector<32x64xf32>
    %c0_21 = arith.constant 0 : index
    %c0_22 = arith.constant 0 : index
    %28 = vector.load %arg9[%c0_21, %c0_22] : memref<1x64xf32, #tpu.memory_space<vmem>>, vector<1x64xf32>
    %29 = vector.broadcast %28 : vector<1x64xf32> to vector<32x64xf32>
    %30 = arith.addf %27, %29 : vector<32x64xf32>
    %c0_23 = arith.constant 0 : index
    %c0_24 = arith.constant 0 : index
    %31 = vector.load %arg10[%c0_23, %c0_24] : memref<32x64xf32, #tpu.memory_space<vmem>>, vector<32x64xf32>
    tpu.vector_store %arg10[%c0_23, %c0_24], %30 {strides = array<i32>} : memref<32x64xf32, #tpu.memory_space<vmem>>, vector<32x64xf32>,
    return
  }
  func.func @transform_0(%arg0: i32) -> (i32, i32) {
    %c0_i32 = arith.constant 0 : i32
    %c0_i32_0 = arith.constant 0 : i32
    return %arg0, %c0_i32 : i32, i32
  }
  func.func @transform_1(%arg0: i32) -> (i32, i32) {
    %c0_i32 = arith.constant 0 : i32
    %c0_i32_0 = arith.constant 0 : i32
    %c0_i32_1 = arith.constant 0 : i32
    return %c0_i32, %c0_i32_0 : i32, i32
  }
  func.func @transform_2(%arg0: i32) -> (i32, i32) {
    %c0_i32 = arith.constant 0 : i32
    %c0_i32_0 = arith.constant 0 : i32
    %c0_i32_1 = arith.constant 0 : i32
    return %c0_i32, %c0_i32_0 : i32, i32
  }
  func.func @transform_3(%arg0: i32) -> (i32, i32) {
    %c0_i32 = arith.constant 0 : i32
    %c0_i32_0 = arith.constant 0 : i32
    %c0_i32_1 = arith.constant 0 : i32
    return %c0_i32, %c0_i32_0 : i32, i32
  }
  func.func @transform_4(%arg0: i32) -> (i32, i32) {
    %c0_i32 = arith.constant 0 : i32
    %c0_i32_0 = arith.constant 0 : i32
    %c0_i32_1 = arith.constant 0 : i32
    return %c0_i32, %c0_i32_0 : i32, i32
  }
  func.func @transform_5(%arg0: i32) -> (i32, i32) {
    %c0_i32 = arith.constant 0 : i32
    %c0_i32_0 = arith.constant 0 : i32
    %c0_i32_1 = arith.constant 0 : i32
    return %c0_i32, %c0_i32_0 : i32, i32
  }
  func.func @transform_6(%arg0: i32) -> (i32, i32) {
    %c0_i32 = arith.constant 0 : i32
    %c0_i32_0 = arith.constant 0 : i32
    %c0_i32_1 = arith.constant 0 : i32
    return %c0_i32, %c0_i32_0 : i32, i32
  }
  func.func @transform_7(%arg0: i32) -> (i32, i32) {
    %c0_i32 = arith.constant 0 : i32
    %c0_i32_0 = arith.constant 0 : i32
    %c0_i32_1 = arith.constant 0 : i32
    return %c0_i32, %c0_i32_0 : i32, i32
  }
  func.func @transform_8(%arg0: i32) -> (i32, i32) {
    %c0_i32 = arith.constant 0 : i32
    %c0_i32_0 = arith.constant 0 : i32
    %c0_i32_1 = arith.constant 0 : i32
    return %c0_i32, %c0_i32_0 : i32, i32
  }
  func.func @transform_9(%arg0: i32) -> (i32, i32) {
    %c0_i32 = arith.constant 0 : i32
    %c0_i32_0 = arith.constant 0 : i32
    return %arg0, %c0_i32 : i32, i32
  }
}

</mosaic_0001>

<llo_original>
// kernel: tpu_custom_call.1
$region0: #{tpu_custom_call.1}
  #allocation0 [shape = 'u32[]', space=smem, size = 0x4, offset = 0x4, fixed_abs, tag = 'smem constant byte address 0x4 - core index']
  #allocation1 [shape = 'u32[144,128]{1,0:T(1,128)}', space=vmem, size = 0x12000, scoped, tag = 'internal scratch']
  %s0 = inlined_call_operand.vmem [shape: f32[64,32], index: 0, kind: input, shape index: {}]
  %s1 = inlined_call_operand.vmem [shape: bf16[32,256], index: 1, kind: input, shape index: {}]
  %s2 = inlined_call_operand.vmem [shape: f32[1,256], index: 2, kind: input, shape index: {}]
  %s3 = inlined_call_operand.vmem [shape: bf16[256,128], index: 3, kind: input, shape index: {}]
  %s4 = inlined_call_operand.vmem [shape: f32[1,128], index: 4, kind: input, shape index: {}]
  %s5 = inlined_call_operand.vmem [shape: bf16[128,64], index: 5, kind: input, shape index: {}]
  %s6 = inlined_call_operand.vmem [shape: f32[1,64], index: 6, kind: input, shape index: {}]
  %s7 = inlined_call_operand.hbm [shape: bf16[64,64], index: 7, kind: input, shape index: {}]
  %s8 = inlined_call_operand.vmem [shape: f32[1,64], index: 8, kind: input, shape index: {}]
  %s9 = inlined_call_operand.hbm [shape: f32[64,64], index: 9, kind: output, shape index: {}]
  %s10 = sld [smem:[#allocation0]]
  $region73: #{tpu_custom_call.1} parent=0
    _
  %s12 = ssub.s32 1, %s10
  %s13 = scalar_select 0, %s12, %s10
  $region1: #{tpu_custom_call.1} parent=0
    #allocation2 [shape = 'u8[16384]{0}', space=vmem, size = 0x4000, scoped, tag = 'input window, operand 7, single buffered']
    #allocation3 [shape = 's32[2]{0}', space=sflag, size = 0x8, scoped, tag = 'scoped memory for tpu_custom_call.1']
    #allocation4 [shape = 's32[2]{0}', space=sflag, size = 0x8, scoped, tag = 'scoped memory for tpu_custom_call.1']
    #allocation5 [shape = 'u8[32768]{0}', space=vmem, size = 0x8000, scoped, tag = 'output window, operand 0']
    %14 = vsyncpa [#allocation3], 0
    %15 = vsyncpa [#allocation4], 0
    %s16 = scalar_lea.sflag [#allocation4], 1
    %17 = vsyncpa %s16, 0
    loop: start=0, step=1, limit=4
    $region2: #{tpu_custom_call.1} parent=1 // loop_pre_header
      _
    $region3: #{tpu_custom_call.1} parent=1 // loop_header
      %s19 = sphi 0, %s23
      %p20 = scmp.ge.s32.totalorder %s19, 4
      %s29 = sphi 0, %s31
      %s32 = sphi 0, %s29
      %s33 = sphi 0, %s32
      %s49 = sphi 0, %s33
      %s53 = sphi 0, %s53
      %s55 = sphi 0, %s53
      %s56 = sphi 0, %s55
      %s70 = sphi 0, %s56
      %s74 = sphi 0, %s74
      %s76 = sphi 0, %s74
      %s77 = sphi 0, %s76
      %s91 = sphi 0, %s77
      %s95 = sphi 0, %s95
      %s97 = sphi 0, %s95
      %s98 = sphi 0, %s97
      %s112 = sphi 0, %s98
      %s116 = sphi 0, %s116
      %s118 = sphi 0, %s116
      %s119 = sphi 0, %s118
      %s133 = sphi 0, %s119
      %s137 = sphi 0, %s137
      %s139 = sphi 0, %s137
      %s140 = sphi 0, %s139
      %s154 = sphi 0, %s140
      %s158 = sphi 0, %s158
      %s160 = sphi 0, %s158
      %s161 = sphi 0, %s160
      %s175 = sphi 0, %s161
      %s179 = sphi 0, %s179
      %s181 = sphi 0, %s179
      %s182 = sphi 0, %s181
      %s196 = sphi 0, %s182
      %s200 = sphi 0, %s200
      %s202 = sphi 0, %s200
      %s203 = sphi 0, %s202
      %s217 = sphi 0, %s203
      %s223 = sphi 0, %s225
      %s226 = sphi 0, %s223
      %s227 = sphi 0, %s226
      %s243 = sphi 0, %s227
    $region4: #{tpu_custom_call.1} parent=1 // loop_header_branch
      %22 = sbr.rel (%p20) target = $region8
    $region5: #{tpu_custom_call.1} parent=1 // loop_body
      %s24 = ssub.s32 %s19, 1
      %s25 = ssub.s32 %s19, 2
      %s26 = sadd.s32 %s19, 1
      %s27 = ssub.s32 %s19, %s26
      %p28 = scmp.eq.s32.totalorder %s27, 0
      %s30 = sadd.s32 %s29, 1
      %s31 = scalar_select %p28, %s29, %s30
      %p34 = pneg %p28
      %p35 = scmp.eq.s32.totalorder %s19, 1
      %p36 = por %p34, %p35
      %p37 = scmp.ne.s32.totalorder %s29, %s32
      %p38 = scmp.eq.s32.totalorder %s19, 0
      %p39 = por %p37, %p38
      %p40 = scmp.ne.s32.totalorder %s29, %s32
      %p41 = scmp.eq.s32.totalorder %s24, 1
      %p42 = por %p40, %p41
      %p43 = scmp.ne.s32.totalorder %s32, %s33
      %p44 = scmp.eq.s32.totalorder %s24, 0
      %p45 = por %p43, %p44
      %p46 = scmp.ne.s32.totalorder %s32, %s33
      %p47 = scmp.eq.s32.totalorder %s25, 1
      %p48 = por %p46, %p47
      %p50 = scmp.ne.s32.totalorder %s33, %s49
      %p51 = scmp.eq.s32.totalorder %s25, 0
      %p52 = por %p50, %p51
      %s54 = sadd.s32 %s53, 1
      %p57 = scmp.eq.s32.totalorder %s19, 1
      %p58 = scmp.ne.s32.totalorder %s53, %s55
      %p59 = scmp.eq.s32.totalorder %s19, 0
      %p60 = por %p58, %p59
      %p61 = scmp.ne.s32.totalorder %s53, %s55
      %p62 = scmp.eq.s32.totalorder %s24, 1
      %p63 = por %p61, %p62
      %p64 = scmp.ne.s32.totalorder %s55, %s56
      %p65 = scmp.eq.s32.totalorder %s24, 0
      %p66 = por %p64, %p65
      %p67 = scmp.ne.s32.totalorder %s55, %s56
      %p68 = scmp.eq.s32.totalorder %s25, 1
      %p69 = por %p67, %p68
      %p71 = scmp.ne.s32.totalorder %s56, %s70
      %p72 = scmp.eq.s32.totalorder %s25, 0
      %p73 = por %p71, %p72
      %s75 = sadd.s32 %s74, 1
      %p78 = scmp.eq.s32.totalorder %s19, 1
      %p79 = scmp.ne.s32.totalorder %s74, %s76
      %p80 = scmp.eq.s32.totalorder %s19, 0
      %p81 = por %p79, %p80
      %p82 = scmp.ne.s32.totalorder %s74, %s76
      %p83 = scmp.eq.s32.totalorder %s24, 1
      %p84 = por %p82, %p83
      %p85 = scmp.ne.s32.totalorder %s76, %s77
      %p86 = scmp.eq.s32.totalorder %s24, 0
      %p87 = por %p85, %p86
      %p88 = scmp.ne.s32.totalorder %s76, %s77
      %p89 = scmp.eq.s32.totalorder %s25, 1
      %p90 = por %p88, %p89
      %p92 = scmp.ne.s32.totalorder %s77, %s91
      %p93 = scmp.eq.s32.totalorder %s25, 0
      %p94 = por %p92, %p93
      %s96 = sadd.s32 %s95, 1
      %p99 = scmp.eq.s32.totalorder %s19, 1
      %p100 = scmp.ne.s32.totalorder %s95, %s97
      %p101 = scmp.eq.s32.totalorder %s19, 0
      %p102 = por %p100, %p101
      %p103 = scmp.ne.s32.totalorder %s95, %s97
      %p104 = scmp.eq.s32.totalorder %s24, 1
      %p105 = por %p103, %p104
      %p106 = scmp.ne.s32.totalorder %s97, %s98
      %p107 = scmp.eq.s32.totalorder %s24, 0
      %p108 = por %p106, %p107
      %p109 = scmp.ne.s32.totalorder %s97, %s98
      %p110 = scmp.eq.s32.totalorder %s25, 1
      %p111 = por %p109, %p110
      %p113 = scmp.ne.s32.totalorder %s98, %s112
      %p114 = scmp.eq.s32.totalorder %s25, 0
      %p115 = por %p113, %p114
      %s117 = sadd.s32 %s116, 1
      %p120 = scmp.eq.s32.totalorder %s19, 1
      %p121 = scmp.ne.s32.totalorder %s116, %s118
      %p122 = scmp.eq.s32.totalorder %s19, 0
      %p123 = por %p121, %p122
      %p124 = scmp.ne.s32.totalorder %s116, %s118
      %p125 = scmp.eq.s32.totalorder %s24, 1
      %p126 = por %p124, %p125
      %p127 = scmp.ne.s32.totalorder %s118, %s119
      %p128 = scmp.eq.s32.totalorder %s24, 0
      %p129 = por %p127, %p128
      %p130 = scmp.ne.s32.totalorder %s118, %s119
      %p131 = scmp.eq.s32.totalorder %s25, 1
      %p132 = por %p130, %p131
      %p134 = scmp.ne.s32.totalorder %s119, %s133
      %p135 = scmp.eq.s32.totalorder %s25, 0
      %p136 = por %p134, %p135
      %s138 = sadd.s32 %s137, 1
      %p141 = scmp.eq.s32.totalorder %s19, 1
      %p142 = scmp.ne.s32.totalorder %s137, %s139
      %p143 = scmp.eq.s32.totalorder %s19, 0
      %p144 = por %p142, %p143
      %p145 = scmp.ne.s32.totalorder %s137, %s139
      %p146 = scmp.eq.s32.totalorder %s24, 1
      %p147 = por %p145, %p146
      %p148 = scmp.ne.s32.totalorder %s139, %s140
      %p149 = scmp.eq.s32.totalorder %s24, 0
      %p150 = por %p148, %p149
      %p151 = scmp.ne.s32.totalorder %s139, %s140
      %p152 = scmp.eq.s32.totalorder %s25, 1
      %p153 = por %p151, %p152
      %p155 = scmp.ne.s32.totalorder %s140, %s154
      %p156 = scmp.eq.s32.totalorder %s25, 0
      %p157 = por %p155, %p156
      %s159 = sadd.s32 %s158, 1
      %p162 = scmp.eq.s32.totalorder %s19, 1
      %p163 = scmp.ne.s32.totalorder %s158, %s160
      %p164 = scmp.eq.s32.totalorder %s19, 0
      %p165 = por %p163, %p164
      %p166 = scmp.ne.s32.totalorder %s158, %s160
      %p167 = scmp.eq.s32.totalorder %s24, 1
      %p168 = por %p166, %p167
      %p169 = scmp.ne.s32.totalorder %s160, %s161
      %p170 = scmp.eq.s32.totalorder %s24, 0
      %p171 = por %p169, %p170
      %p172 = scmp.ne.s32.totalorder %s160, %s161
      %p173 = scmp.eq.s32.totalorder %s25, 1
      %p174 = por %p172, %p173
      %p176 = scmp.ne.s32.totalorder %s161, %s175
      %p177 = scmp.eq.s32.totalorder %s25, 0
      %p178 = por %p176, %p177
      %s180 = sadd.s32 %s179, 1
      %p183 = scmp.eq.s32.totalorder %s19, 1
      %p184 = scmp.ne.s32.totalorder %s179, %s181
      %p185 = scmp.eq.s32.totalorder %s19, 0
      %p186 = por %p184, %p185
      %p187 = scmp.ne.s32.totalorder %s179, %s181
      %p188 = scmp.eq.s32.totalorder %s24, 1
      %p189 = por %p187, %p188
      %p190 = scmp.ne.s32.totalorder %s181, %s182
      %p191 = scmp.eq.s32.totalorder %s24, 0
      %p192 = por %p190, %p191
      %p193 = scmp.ne.s32.totalorder %s181, %s182
      %p194 = scmp.eq.s32.totalorder %s25, 1
      %p195 = por %p193, %p194
      %p197 = scmp.ne.s32.totalorder %s182, %s196
      %p198 = scmp.eq.s32.totalorder %s25, 0
      %p199 = por %p197, %p198
      %s201 = sadd.s32 %s200, 1
      %p204 = scmp.eq.s32.totalorder %s19, 1
      %p205 = scmp.ne.s32.totalorder %s200, %s202
      %p206 = scmp.eq.s32.totalorder %s19, 0
      %p207 = por %p205, %p206
      %p208 = scmp.ne.s32.totalorder %s200, %s202
      %p209 = scmp.eq.s32.totalorder %s24, 1
      %p210 = por %p208, %p209
      %p211 = scmp.ne.s32.totalorder %s202, %s203
      %p212 = scmp.eq.s32.totalorder %s24, 0
      %p213 = por %p211, %p212
      %p214 = scmp.ne.s32.totalorder %s202, %s203
      %p215 = scmp.eq.s32.totalorder %s25, 1
      %p216 = por %p214, %p215
      %p218 = scmp.ne.s32.totalorder %s203, %s217
      %p219 = scmp.eq.s32.totalorder %s25, 0
      %p220 = por %p218, %p219
      %s221 = ssub.s32 %s19, %s26
      %p222 = scmp.eq.s32.totalorder %s221, 0
      %s224 = sadd.s32 %s223, 1
      %s225 = scalar_select %p222, %s223, %s224
      %p228 = pneg %p222
      %p229 = scmp.eq.s32.totalorder %s19, 1
      %p230 = por %p228, %p229
      %p231 = scmp.ne.s32.totalorder %s223, %s226
      %p232 = scmp.eq.s32.totalorder %s19, 0
      %p233 = por %p231, %p232
      %p234 = scmp.ne.s32.totalorder %s223, %s226
      %p235 = scmp.eq.s32.totalorder %s24, 1
      %p236 = por %p234, %p235
      %p237 = scmp.ne.s32.totalorder %s226, %s227
      %p238 = scmp.eq.s32.totalorder %s24, 0
      %p239 = por %p237, %p238
      %p240 = scmp.ne.s32.totalorder %s226, %s227
      %p241 = scmp.eq.s32.totalorder %s25, 1
      %p242 = por %p240, %p241
      %p244 = scmp.ne.s32.totalorder %s227, %s243
      %p245 = scmp.eq.s32.totalorder %s25, 0
      %p246 = por %p244, %p245
      %p247 = scmp.le.s32.totalorder 1, %s19
      %p248 = scmp.lt.s32.totalorder %s19, 3
      %p249 = pnand %p247, %p248
      %p250 = pneg %p249
      // Predicated region
      $region9: #{tpu_custom_call.1} parent=5 // pred_check
        _
      $region10: #{tpu_custom_call.1} parent=5 // pred_check_branch
        %252 = sbr.rel (%p249) target = $region12
      $region11: #{tpu_custom_call.1} parent=5 // pred_region
        %s253 = ssub.s32 %s19, 1
        // Predicated region
        $region13: #{tpu_custom_call.1} parent=11 // pred_check
          %p254 = pneg %p66
        $region14: #{tpu_custom_call.1} parent=11 // pred_check_branch
          %256 = sbr.rel (%p254) target = $region16
        $region15: #{tpu_custom_call.1} parent=11 // pred_region
          _
        $region16: #{tpu_custom_call.1} parent=11 // pred_fallthru
          _
        // Predicated region
        $region17: #{tpu_custom_call.1} parent=11 // pred_check
          %p257 = pneg %p87
        $region18: #{tpu_custom_call.1} parent=11 // pred_check_branch
          %259 = sbr.rel (%p257) target = $region20
        $region19: #{tpu_custom_call.1} parent=11 // pred_region
          _
        $region20: #{tpu_custom_call.1} parent=11 // pred_fallthru
          _
        // Predicated region
        $region21: #{tpu_custom_call.1} parent=11 // pred_check
          %p260 = pneg %p108
        $region22: #{tpu_custom_call.1} parent=11 // pred_check_branch
          %262 = sbr.rel (%p260) target = $region24
        $region23: #{tpu_custom_call.1} parent=11 // pred_region
          _
        $region24: #{tpu_custom_call.1} parent=11 // pred_fallthru
          _
        // Predicated region
        $region25: #{tpu_custom_call.1} parent=11 // pred_check
          %p263 = pneg %p129
        $region26: #{tpu_custom_call.1} parent=11 // pred_check_branch
          %265 = sbr.rel (%p263) target = $region28
        $region27: #{tpu_custom_call.1} parent=11 // pred_region
          _
        $region28: #{tpu_custom_call.1} parent=11 // pred_fallthru
          _
        // Predicated region
        $region29: #{tpu_custom_call.1} parent=11 // pred_check
          %p266 = pneg %p150
        $region30: #{tpu_custom_call.1} parent=11 // pred_check_branch
          %268 = sbr.rel (%p266) target = $region32
        $region31: #{tpu_custom_call.1} parent=11 // pred_region
          _
        $region32: #{tpu_custom_call.1} parent=11 // pred_fallthru
          _
        // Predicated region
        $region33: #{tpu_custom_call.1} parent=11 // pred_check
          %p269 = pneg %p171
        $region34: #{tpu_custom_call.1} parent=11 // pred_check_branch
          %271 = sbr.rel (%p269) target = $region36
        $region35: #{tpu_custom_call.1} parent=11 // pred_region
          _
        $region36: #{tpu_custom_call.1} parent=11 // pred_fallthru
          _
        // Predicated region
        $region37: #{tpu_custom_call.1} parent=11 // pred_check
          %p272 = pneg %p192
        $region38: #{tpu_custom_call.1} parent=11 // pred_check_branch
          %274 = sbr.rel (%p272) target = $region40
        $region39: #{tpu_custom_call.1} parent=11 // pred_region
          %s276 = ssub.s32 512, 512
          %277 = vsyncadd [#allocation3], %s276
          %s278 = sshll.u32 [#allocation2], 4
          %s279 = int_to_ptr.vmem [resolvable:$true] %s278
          %284 = dma.hbm_to_vmem [thread:$0]  %s7, 512, %s279, [#allocation3], 64, 64, 4
        $region40: #{tpu_custom_call.1} parent=11 // pred_fallthru
          _
        // Predicated region
        $region41: #{tpu_custom_call.1} parent=11 // pred_check
          %p285 = pneg %p213
        $region42: #{tpu_custom_call.1} parent=11 // pred_check_branch
          %287 = sbr.rel (%p285) target = $region44
        $region43: #{tpu_custom_call.1} parent=11 // pred_region
          _
        $region44: #{tpu_custom_call.1} parent=11 // pred_fallthru
          _
      $region12: #{tpu_custom_call.1} parent=5 // pred_fallthru
        _
      %p288 = scmp.lt.s32.totalorder %s19, 2
      // Predicated region
      $region45: #{tpu_custom_call.1} parent=5 // pred_check
        %p289 = pneg %p288
      $region46: #{tpu_custom_call.1} parent=5 // pred_check_branch
        %291 = sbr.rel (%p289) target = $region48
      $region47: #{tpu_custom_call.1} parent=5 // pred_region
        // Predicated region
        $region49: #{tpu_custom_call.1} parent=47 // pred_check
          %p292 = pneg %p39
        $region50: #{tpu_custom_call.1} parent=47 // pred_check_branch
          %294 = sbr.rel (%p292) target = $region52
        $region51: #{tpu_custom_call.1} parent=47 // pred_region
          %s295 = smul.u32 4, %s19
          %p296 = scmp.lt.s32.totalorder %s295, 7
          %s297 = scalar_select %p296, %s295, 7
          %s298 = smul.addr %s297, 8
          %s299 = scalar_lea.vmem %s0, %s298
          %s300 = smul.u32 4, %s19
        $region52: #{tpu_custom_call.1} parent=47 // pred_fallthru
          _
      $region48: #{tpu_custom_call.1} parent=5 // pred_fallthru
        _
      %p301 = scmp.le.s32.totalorder 1, %s19
      %p302 = scmp.lt.s32.totalorder %s19, 3
      %p303 = pnand %p301, %p302
      %p304 = pneg %p303
      // Predicated region
      $region53: #{tpu_custom_call.1} parent=5 // pred_check
        _
      $region54: #{tpu_custom_call.1} parent=5 // pred_check_branch
        %306 = sbr.rel (%p303) target = $region56
      $region55: #{tpu_custom_call.1} parent=5 // pred_region
        %s307 = ssub.s32 %s19, 1
        // Predicated region
        $region57: #{tpu_custom_call.1} parent=55 // pred_check
          %p308 = pneg %p192
        $region58: #{tpu_custom_call.1} parent=55 // pred_check_branch
          %310 = sbr.rel (%p308) target = $region60
        $region59: #{tpu_custom_call.1} parent=55 // pred_region
          %311 = dma.done [#allocation3], 512
        $region60: #{tpu_custom_call.1} parent=55 // pred_fallthru
          _
        %s312 = smul.u32 4, %s24
        %p313 = scmp.lt.s32.totalorder %s312, 7
        %s314 = scalar_select %p313, %s312, 7
        %s315 = smul.addr %s314, 8
        %s316 = scalar_lea.vmem %s0, %s315
        %p317 = pneg %p45
        %p318 = pneg %p42
        %p319 = pneg %p66
        %p320 = pneg %p63
        %p321 = pneg %p87
        %p322 = pneg %p84
        %p323 = pneg %p108
        %p324 = pneg %p105
        %p325 = pneg %p129
        %p326 = pneg %p126
        %p327 = pneg %p150
        %p328 = pneg %p147
        %p329 = pneg %p171
        %p330 = pneg %p168
        %p331 = pneg %p192
        %p332 = pneg %p189
        %p333 = pneg %p213
        %p334 = pneg %p210
        %p335 = pneg %p239
        %p336 = pneg %p236
        %s337 = sand.u32 %s226, 1
        %s338 = scalar_lea.sflag [#allocation4], %s337
        %s339 = sand.u32 %s226, 1
        %s340 = smul.addr %s339, 32
        %s341 = scalar_lea.vmem [#allocation5], %s340
        %s342 = smul.u32 4, %s24
        %p343 = scmp.lt.s32.totalorder %s342, 7
        %s344 = scalar_select %p343, %s342, 7
        %s345 = smul.addr %s344, 8
        %s346 = scalar_lea.vmem %s0, %s345
        %s347 = smul.u32 4, %s24
        %s348 = smul.u32 4, %s24
        %v350 = vld [vmem:[%s346] sm:$0xff]
        %v351 = vld [vmem:[%s346 + $0x8] sm:$0xff]
        %v352 = vld [vmem:[%s346 + $0x10] sm:$0xff]
        %v353 = vld [vmem:[%s346 + $0x18] sm:$0xff]
        %v354 = vpack.c.bf16 %v351, %v350
        %v355 = vpack.c.bf16 %v353, %v352
        %v356 = vld [vmem:[%s1] sm:$0xff]
        %v357 = vld [vmem:[%s1 + $0x8] sm:$0xff]
        %v358 = vld [vmem:[%s1 + $0x10] sm:$0xff]
        %v359 = vld [vmem:[%s1 + $0x18] sm:$0xff]
        %v360 = vld [vmem:[%s2] sm:$0x3]
        %v362 = vlaneseq
        %v363 = vshrl.u32 %v362, 7
        %v364 = vsub.s32 0, %v363
        %v365 = vrot.slane %v360, %v364
        %v366 = vlaneseq
        %v367 = vshrl.u32 %v366, 7
        %v368 = vsub.s32 1, %v367
        %v369 = vrot.slane %v360, %v368
        %v376 = vunpack.c.l.b16 %v356
        %v377 = vunpack.c.h.b16 %v356
        %v378 = vunpack.c.l.b16 %v357
        %v379 = vunpack.c.h.b16 %v357
        %v380 = vunpack.c.l.b16 %v358
        %v381 = vunpack.c.h.b16 %v358
        %v382 = vunpack.c.l.b16 %v359
        %v383 = vunpack.c.h.b16 %v359
        %v384 = vpack.c.b16 %v378, %v376
        %v385 = vpack.c.b16 %v379, %v377
        %v386 = vpack.c.b16 %v382, %v380
        %v387 = vpack.c.b16 %v383, %v381
        %vm392 = vcmask 261120
        %v394 = vsel %vm392, %v354, 0
        %v397 = vsel %vm392, %v355, 0
        %399 = vmatprep.subr.bf16.mxu0 %v385
        %400 = vmatpush1.bf16.msra.mxu0 %v384
        %401 = vmatprep.subr.bf16.mxu0 %v387
        %402 = vmatpush1.bf16.msra.mxu0 %v386
        %403 = vmatprep.subr.bf16.mxu0 0
        %404 = vmatpush1.bf16.msra.mxu0 0
        %405 = vmatprep.subr.bf16.mxu0 0
        %406 = vmatpush1.bf16.msra.mxu0 0
        %407 = vmatprep.subr.bf16.mxu0 0
        %408 = vmatpush1.bf16.msra.mxu0 0
        %409 = vmatprep.subr.bf16.mxu0 0
        %410 = vmatpush1.bf16.msra.mxu0 0
        %411 = vmatprep.subr.bf16.mxu0 0
        %412 = vmatpush1.bf16.msra.mxu0 0
        %413 = vmatprep.subr.bf16.mxu0 0
        %414 = vmatpush1.bf16.msra.mxu0 0
        %415 = vmatprep.subr.bf16.mxu0 0
        %416 = vmatpush1.bf16.msra.mxu0 0
        %417 = vmatprep.subr.bf16.mxu0 0
        %418 = vmatpush1.bf16.msra.mxu0 0
        %419 = vmatprep.subr.bf16.mxu0 0
        %420 = vmatpush1.bf16.msra.mxu0 0
        %421 = vmatprep.subr.bf16.mxu0 0
        %422 = vmatpush1.bf16.msra.mxu0 0
        %423 = vmatprep.subr.bf16.mxu0 0
        %424 = vmatpush1.bf16.msra.mxu0 0
        %425 = vmatprep.subr.bf16.mxu0 0
        %426 = vmatpush1.bf16.msra.mxu0 0
        %427 = vmatprep.subr.bf16.mxu0 0
        %428 = vmatpush1.bf16.msra.mxu0 0
        %429 = vmatprep.subr.bf16.mxu0 0
        %430 = vmatpush1.bf16.msra.mxu0 0
        %431 = vmatprep.mubr.bf16.mxu0 0
        %432 = vmatmul.mubr.bf16.gmra.mrb[0].mxu0 %v394
        %v433 = vpop.f32.mrb[0].mxu0
        %v434 = vadd.f32 %v365, %v433
        %v435 = vpop.f32.mrb[0].mxu0
        %v436 = vadd.f32 %v369, %v435
        %v437 = vpop.f32.mrb[0].mxu0
        %v438 = vadd.f32 %v365, %v437
        %v439 = vpop.f32.mrb[0].mxu0
        %v440 = vadd.f32 %v369, %v439
        %441 = vmatprep.mubr.bf16.mxu0 0
        %442 = vmatmul.mubr.bf16.gmra.mrb[0].mxu0 %v397
        %v443 = vpop.f32.mrb[0].mxu0
        %v444 = vadd.f32 %v365, %v443
        %v445 = vpop.f32.mrb[0].mxu0
        %v446 = vadd.f32 %v369, %v445
        %v447 = vpop.f32.mrb[0].mxu0
        %v448 = vadd.f32 %v365, %v447
        %v449 = vpop.f32.mrb[0].mxu0
        %v450 = vadd.f32 %v369, %v449
        %451 = vdwg.mxu0
        %v452 = vmax.f32 %v434, 0.0
        %v453 = vmax.f32 %v436, 0.0
        %v454 = vmax.f32 %v438, 0.0
        %v455 = vmax.f32 %v440, 0.0
        %v456 = vmax.f32 %v444, 0.0
        %v457 = vmax.f32 %v446, 0.0
        %v458 = vmax.f32 %v448, 0.0
        %v459 = vmax.f32 %v450, 0.0
        %v460 = vpack.c.bf16 %v454, %v452
        %v461 = vpack.c.bf16 %v455, %v453
        %v462 = vpack.c.bf16 %v458, %v456
        %v463 = vpack.c.bf16 %v459, %v457
        %v464 = vld [vmem:[%s3] sm:$0xf]
        %v465 = vld [vmem:[%s3 + $0x4] sm:$0xf]
        %v466 = vld [vmem:[%s3 + $0x8] sm:$0xf]
        %v467 = vld [vmem:[%s3 + $0xc] sm:$0xf]
        %v468 = vld [vmem:[%s3 + $0x10] sm:$0xf]
        %v469 = vld [vmem:[%s3 + $0x14] sm:$0xf]
        %v470 = vld [vmem:[%s3 + $0x18] sm:$0xf]
        %v471 = vld [vmem:[%s3 + $0x1c] sm:$0xf]
        %v472 = vld [vmem:[%s3 + $0x20] sm:$0xf]
        %v473 = vld [vmem:[%s3 + $0x24] sm:$0xf]
        %v474 = vld [vmem:[%s3 + $0x28] sm:$0xf]
        %v475 = vld [vmem:[%s3 + $0x2c] sm:$0xf]
        %v476 = vld [vmem:[%s3 + $0x30] sm:$0xf]
        %v477 = vld [vmem:[%s3 + $0x34] sm:$0xf]
        %v478 = vld [vmem:[%s3 + $0x38] sm:$0xf]
        %v479 = vld [vmem:[%s3 + $0x3c] sm:$0xf]
        %v480 = vld [vmem:[%s3 + $0x40] sm:$0xf]
        %v481 = vld [vmem:[%s3 + $0x44] sm:$0xf]
        %v482 = vld [vmem:[%s3 + $0x48] sm:$0xf]
        %v483 = vld [vmem:[%s3 + $0x4c] sm:$0xf]
        %v484 = vld [vmem:[%s3 + $0x50] sm:$0xf]
        %v485 = vld [vmem:[%s3 + $0x54] sm:$0xf]
        %v486 = vld [vmem:[%s3 + $0x58] sm:$0xf]
        %v487 = vld [vmem:[%s3 + $0x5c] sm:$0xf]
        %v488 = vld [vmem:[%s3 + $0x60] sm:$0xf]
        %v489 = vld [vmem:[%s3 + $0x64] sm:$0xf]
        %v490 = vld [vmem:[%s3 + $0x68] sm:$0xf]
        %v491 = vld [vmem:[%s3 + $0x6c] sm:$0xf]
        %v492 = vld [vmem:[%s3 + $0x70] sm:$0xf]
        %v493 = vld [vmem:[%s3 + $0x74] sm:$0xf]
        %v494 = vld [vmem:[%s3 + $0x78] sm:$0xf]
        %v495 = vld [vmem:[%s3 + $0x7c] sm:$0xf]
        %v496 = vld [vmem:[%s4] sm:$0x1]
        %v498 = vlaneseq
        %v499 = vshrl.u32 %v498, 7
        %v500 = vsub.s32 0, %v499
        %v501 = vrot.slane %v496, %v500
        %v535 = vunpack.c.l.b16 %v464
        %v536 = vunpack.c.l.b16 %v465
        %v537 = vunpack.c.l.b16 %v466
        %v538 = vunpack.c.l.b16 %v467
        %v539 = vunpack.c.l.b16 %v468
        %v540 = vunpack.c.l.b16 %v469
        %v541 = vunpack.c.l.b16 %v470
        %v542 = vunpack.c.l.b16 %v471
        %v543 = vunpack.c.l.b16 %v472
        %v544 = vunpack.c.l.b16 %v473
        %v545 = vunpack.c.l.b16 %v474
        %v546 = vunpack.c.l.b16 %v475
        %v547 = vunpack.c.l.b16 %v476
        %v548 = vunpack.c.l.b16 %v477
        %v549 = vunpack.c.l.b16 %v478
        %v550 = vunpack.c.l.b16 %v479
        %v551 = vunpack.c.l.b16 %v480
        %v552 = vunpack.c.l.b16 %v481
        %v553 = vunpack.c.l.b16 %v482
        %v554 = vunpack.c.l.b16 %v483
        %v555 = vunpack.c.l.b16 %v484
        %v556 = vunpack.c.l.b16 %v485
        %v557 = vunpack.c.l.b16 %v486
        %v558 = vunpack.c.l.b16 %v487
        %v559 = vunpack.c.l.b16 %v488
        %v560 = vunpack.c.l.b16 %v489
        %v561 = vunpack.c.l.b16 %v490
        %v562 = vunpack.c.l.b16 %v491
        %v563 = vunpack.c.l.b16 %v492
        %v564 = vunpack.c.l.b16 %v493
        %v565 = vunpack.c.l.b16 %v494
        %v566 = vunpack.c.l.b16 %v495
        %v567 = vpack.c.b16 %v536, %v535
        %v568 = vpack.c.b16 %v538, %v537
        %v569 = vpack.c.b16 %v540, %v539
        %v570 = vpack.c.b16 %v542, %v541
        %v571 = vpack.c.b16 %v544, %v543
        %v572 = vpack.c.b16 %v546, %v545
        %v573 = vpack.c.b16 %v548, %v547
        %v574 = vpack.c.b16 %v550, %v549
        %v575 = vpack.c.b16 %v552, %v551
        %v576 = vpack.c.b16 %v554, %v553
        %v577 = vpack.c.b16 %v556, %v555
        %v578 = vpack.c.b16 %v558, %v557
        %v579 = vpack.c.b16 %v560, %v559
        %v580 = vpack.c.b16 %v562, %v561
        %v581 = vpack.c.b16 %v564, %v563
        %v582 = vpack.c.b16 %v566, %v565
        %599 = vmatprep.subr.bf16.mxu0 0
        %600 = vmatpush1.bf16.msra.mxu0 %v567
        %601 = vmatprep.subr.bf16.mxu0 0
        %602 = vmatpush1.bf16.msra.mxu0 %v568
        %603 = vmatprep.subr.bf16.mxu0 0
        %604 = vmatpush1.bf16.msra.mxu0 %v569
        %605 = vmatprep.subr.bf16.mxu0 0
        %606 = vmatpush1.bf16.msra.mxu0 %v570
        %607 = vmatprep.subr.bf16.mxu0 0
        %608 = vmatpush1.bf16.msra.mxu0 %v571
        %609 = vmatprep.subr.bf16.mxu0 0
        %610 = vmatpush1.bf16.msra.mxu0 %v572
        %611 = vmatprep.subr.bf16.mxu0 0
        %612 = vmatpush1.bf16.msra.mxu0 %v573
        %613 = vmatprep.subr.bf16.mxu0 0
        %614 = vmatpush1.bf16.msra.mxu0 %v574
        %615 = vmatprep.subr.bf16.mxu0 0
        %616 = vmatpush1.bf16.msra.mxu0 %v575
        %617 = vmatprep.subr.bf16.mxu0 0
        %618 = vmatpush1.bf16.msra.mxu0 %v576
        %619 = vmatprep.subr.bf16.mxu0 0
        %620 = vmatpush1.bf16.msra.mxu0 %v577
        %621 = vmatprep.subr.bf16.mxu0 0
        %622 = vmatpush1.bf16.msra.mxu0 %v578
        %623 = vmatprep.subr.bf16.mxu0 0
        %624 = vmatpush1.bf16.msra.mxu0 %v579
        %625 = vmatprep.subr.bf16.mxu0 0
        %626 = vmatpush1.bf16.msra.mxu0 %v580
        %627 = vmatprep.subr.bf16.mxu0 0
        %628 = vmatpush1.bf16.msra.mxu0 %v581
        %629 = vmatprep.subr.bf16.mxu0 0
        %630 = vmatpush1.bf16.msra.mxu0 %v582
        %631 = vmatprep.mubr.bf16.mxu0 %v461
        %632 = vmatmul.mubr.bf16.gmra.mrb[0].mxu0 %v460
        %v633 = vpop.f32.mrb[0].mxu0
        %v634 = vadd.f32 %v501, %v633
        %v635 = vpop.f32.mrb[0].mxu0
        %v636 = vpop.f32.mrb[0].mxu0
        %v637 = vadd.f32 %v501, %v636
        %v638 = vpop.f32.mrb[0].mxu0
        %639 = vmatprep.mubr.bf16.mxu0 %v463
        %640 = vmatmul.mubr.bf16.gmra.mrb[0].mxu0 %v462
        %v641 = vpop.f32.mrb[0].mxu0
        %v642 = vadd.f32 %v501, %v641
        %v643 = vpop.f32.mrb[0].mxu0
        %v644 = vpop.f32.mrb[0].mxu0
        %v645 = vadd.f32 %v501, %v644
        %v646 = vpop.f32.mrb[0].mxu0
        %647 = vdwg.mxu0
        %v648 = vmax.f32 %v634, 0.0
        %v649 = vmax.f32 %v637, 0.0
        %v650 = vmax.f32 %v642, 0.0
        %v651 = vmax.f32 %v645, 0.0
        %v652 = vpack.c.bf16 %v649, %v648
        %v653 = vpack.c.bf16 %v651, %v650
        %v654 = vld [vmem:[%s5] sm:$0xf]
        %v655 = vld [vmem:[%s5 + $0x4] sm:$0xf]
        %v656 = vld [vmem:[%s5 + $0x8] sm:$0xf]
        %v657 = vld [vmem:[%s5 + $0xc] sm:$0xf]
        %v658 = vld [vmem:[%s5 + $0x10] sm:$0xf]
        %v659 = vld [vmem:[%s5 + $0x14] sm:$0xf]
        %v660 = vld [vmem:[%s5 + $0x18] sm:$0xf]
        %v661 = vld [vmem:[%s5 + $0x1c] sm:$0xf]
        %v662 = vld [vmem:[%s5 + $0x20] sm:$0xf]
        %v663 = vld [vmem:[%s5 + $0x24] sm:$0xf]
        %v664 = vld [vmem:[%s5 + $0x28] sm:$0xf]
        %v665 = vld [vmem:[%s5 + $0x2c] sm:$0xf]
        %v666 = vld [vmem:[%s5 + $0x30] sm:$0xf]
        %v667 = vld [vmem:[%s5 + $0x34] sm:$0xf]
        %v668 = vld [vmem:[%s5 + $0x38] sm:$0xf]
        %v669 = vld [vmem:[%s5 + $0x3c] sm:$0xf]
        %v670 = vld [vmem:[%s6] sm:$0x1]
        %v672 = vlaneseq
        %v673 = vshrl.u32 %v672, 7
        %v674 = vsub.s32 0, %v673
        %v675 = vrot.slane %v670, %v674
        %v693 = vunpack.c.l.b16 %v654
        %v694 = vunpack.c.l.b16 %v655
        %v695 = vunpack.c.l.b16 %v656
        %v696 = vunpack.c.l.b16 %v657
        %v697 = vunpack.c.l.b16 %v658
        %v698 = vunpack.c.l.b16 %v659
        %v699 = vunpack.c.l.b16 %v660
        %v700 = vunpack.c.l.b16 %v661
        %v701 = vunpack.c.l.b16 %v662
        %v702 = vunpack.c.l.b16 %v663
        %v703 = vunpack.c.l.b16 %v664
        %v704 = vunpack.c.l.b16 %v665
        %v705 = vunpack.c.l.b16 %v666
        %v706 = vunpack.c.l.b16 %v667
        %v707 = vunpack.c.l.b16 %v668
        %v708 = vunpack.c.l.b16 %v669
        %v709 = vpack.c.b16 %v694, %v693
        %v710 = vpack.c.b16 %v696, %v695
        %v711 = vpack.c.b16 %v698, %v697
        %v712 = vpack.c.b16 %v700, %v699
        %v713 = vpack.c.b16 %v702, %v701
        %v714 = vpack.c.b16 %v704, %v703
        %v715 = vpack.c.b16 %v706, %v705
        %v716 = vpack.c.b16 %v708, %v707
        %725 = vmatprep.subr.bf16.mxu0 0
        %726 = vmatpush1.bf16.msra.mxu0 %v709
        %727 = vmatprep.subr.bf16.mxu0 0
        %728 = vmatpush1.bf16.msra.mxu0 %v710
        %729 = vmatprep.subr.bf16.mxu0 0
        %730 = vmatpush1.bf16.msra.mxu0 %v711
        %731 = vmatprep.subr.bf16.mxu0 0
        %732 = vmatpush1.bf16.msra.mxu0 %v712
        %733 = vmatprep.subr.bf16.mxu0 0
        %734 = vmatpush1.bf16.msra.mxu0 %v713
        %735 = vmatprep.subr.bf16.mxu0 0
        %736 = vmatpush1.bf16.msra.mxu0 %v714
        %737 = vmatprep.subr.bf16.mxu0 0
        %738 = vmatpush1.bf16.msra.mxu0 %v715
        %739 = vmatprep.subr.bf16.mxu0 0
        %740 = vmatpush1.bf16.msra.mxu0 %v716
        %741 = vmatprep.subr.bf16.mxu0 0
        %742 = vmatpush1.bf16.msra.mxu0 0
        %743 = vmatprep.subr.bf16.mxu0 0
        %744 = vmatpush1.bf16.msra.mxu0 0
        %745 = vmatprep.subr.bf16.mxu0 0
        %746 = vmatpush1.bf16.msra.mxu0 0
        %747 = vmatprep.subr.bf16.mxu0 0
        %748 = vmatpush1.bf16.msra.mxu0 0
        %749 = vmatprep.subr.bf16.mxu0 0
        %750 = vmatpush1.bf16.msra.mxu0 0
        %751 = vmatprep.subr.bf16.mxu0 0
        %752 = vmatpush1.bf16.msra.mxu0 0
        %753 = vmatprep.subr.bf16.mxu0 0
        %754 = vmatpush1.bf16.msra.mxu0 0
        %755 = vmatprep.subr.bf16.mxu0 0
        %756 = vmatpush1.bf16.msra.mxu0 0
        %757 = vmatprep.mubr.bf16.mxu0 0
        %758 = vmatmul.mubr.bf16.gmra.mrb[0].mxu0 %v652
        %v759 = vpop.f32.mrb[0].mxu0
        %v760 = vadd.f32 %v675, %v759
        %v761 = vpop.f32.mrb[0].mxu0
        %v762 = vpop.f32.mrb[0].mxu0
        %v763 = vadd.f32 %v675, %v762
        %v764 = vpop.f32.mrb[0].mxu0
        %765 = vmatprep.mubr.bf16.mxu0 0
        %766 = vmatmul.mubr.bf16.gmra.mrb[0].mxu0 %v653
        %v767 = vpop.f32.mrb[0].mxu0
        %v768 = vadd.f32 %v675, %v767
        %v769 = vpop.f32.mrb[0].mxu0
        %v770 = vpop.f32.mrb[0].mxu0
        %v771 = vadd.f32 %v675, %v770
        %v772 = vpop.f32.mrb[0].mxu0
        %773 = vdwg.mxu0
        %v774 = vmax.f32 %v760, 0.0
        %v775 = vmax.f32 %v763, 0.0
        %v776 = vmax.f32 %v768, 0.0
        %v777 = vmax.f32 %v771, 0.0
        %v778 = vpack.c.bf16 %v775, %v774
        %v779 = vpack.c.bf16 %v777, %v776
        %v780 = vld [vmem:[#allocation2] sm:$0xf]
        %v781 = vld [vmem:[#allocation2 + $0x4] sm:$0xf]
        %v782 = vld [vmem:[#allocation2 + $0x8] sm:$0xf]
        %v783 = vld [vmem:[#allocation2 + $0xc] sm:$0xf]
        %v784 = vld [vmem:[#allocation2 + $0x10] sm:$0xf]
        %v785 = vld [vmem:[#allocation2 + $0x14] sm:$0xf]
        %v786 = vld [vmem:[#allocation2 + $0x18] sm:$0xf]
        %v787 = vld [vmem:[#allocation2 + $0x1c] sm:$0xf]
        %v788 = vld [vmem:[%s8] sm:$0x1]
        %v790 = vlaneseq
        %v791 = vshrl.u32 %v790, 7
        %v792 = vsub.s32 0, %v791
        %v793 = vrot.slane %v788, %v792
        %v803 = vunpack.c.l.b16 %v780
        %v804 = vunpack.c.l.b16 %v781
        %v805 = vunpack.c.l.b16 %v782
        %v806 = vunpack.c.l.b16 %v783
        %v807 = vunpack.c.l.b16 %v784
        %v808 = vunpack.c.l.b16 %v785
        %v809 = vunpack.c.l.b16 %v786
        %v810 = vunpack.c.l.b16 %v787
        %v811 = vpack.c.b16 %v804, %v803
        %v812 = vpack.c.b16 %v806, %v805
        %v813 = vpack.c.b16 %v808, %v807
        %v814 = vpack.c.b16 %v810, %v809
        %vm819 = vcmask 523264
        %v821 = vsel %vm819, %v778, 0
        %v824 = vsel %vm819, %v779, 0
        %826 = vmatprep.subr.bf16.mxu0 0
        %827 = vmatpush1.bf16.msra.mxu0 %v811
        %828 = vmatprep.subr.bf16.mxu0 0
        %829 = vmatpush1.bf16.msra.mxu0 %v812
        %830 = vmatprep.subr.bf16.mxu0 0
        %831 = vmatpush1.bf16.msra.mxu0 %v813
        %832 = vmatprep.subr.bf16.mxu0 0
        %833 = vmatpush1.bf16.msra.mxu0 %v814
        %834 = vmatprep.subr.bf16.mxu0 0
        %835 = vmatpush1.bf16.msra.mxu0 0
        %836 = vmatprep.subr.bf16.mxu0 0
        %837 = vmatpush1.bf16.msra.mxu0 0
        %838 = vmatprep.subr.bf16.mxu0 0
        %839 = vmatpush1.bf16.msra.mxu0 0
        %840 = vmatprep.subr.bf16.mxu0 0
        %841 = vmatpush1.bf16.msra.mxu0 0
        %842 = vmatprep.subr.bf16.mxu0 0
        %843 = vmatpush1.bf16.msra.mxu0 0
        %844 = vmatprep.subr.bf16.mxu0 0
        %845 = vmatpush1.bf16.msra.mxu0 0
        %846 = vmatprep.subr.bf16.mxu0 0
        %847 = vmatpush1.bf16.msra.mxu0 0
        %848 = vmatprep.subr.bf16.mxu0 0
        %849 = vmatpush1.bf16.msra.mxu0 0
        %850 = vmatprep.subr.bf16.mxu0 0
        %851 = vmatpush1.bf16.msra.mxu0 0
        %852 = vmatprep.subr.bf16.mxu0 0
        %853 = vmatpush1.bf16.msra.mxu0 0
        %854 = vmatprep.subr.bf16.mxu0 0
        %855 = vmatpush1.bf16.msra.mxu0 0
        %856 = vmatprep.subr.bf16.mxu0 0
        %857 = vmatpush1.bf16.msra.mxu0 0
        %858 = vmatprep.mubr.bf16.mxu0 0
        %859 = vmatmul.mubr.bf16.gmra.mrb[0].mxu0 %v821
        %v860 = vpop.f32.mrb[0].mxu0
        %v861 = vadd.f32 %v793, %v860
        %v862 = vpop.f32.mrb[0].mxu0
        %v863 = vpop.f32.mrb[0].mxu0
        %v864 = vadd.f32 %v793, %v863
        %v865 = vpop.f32.mrb[0].mxu0
        %866 = vmatprep.mubr.bf16.mxu0 0
        %867 = vmatmul.mubr.bf16.gmra.mrb[0].mxu0 %v824
        %v868 = vpop.f32.mrb[0].mxu0
        %v869 = vadd.f32 %v793, %v868
        %v870 = vpop.f32.mrb[0].mxu0
        %v871 = vpop.f32.mrb[0].mxu0
        %v872 = vadd.f32 %v793, %v871
        %v873 = vpop.f32.mrb[0].mxu0
        %874 = vdwg.mxu0
        %875 = vst.msk [vmem:[%s341] sm:$0xff] %vm819, %v861
        %876 = vst.msk [vmem:[%s341 + $0x8] sm:$0xff] %vm819, %v864
        %877 = vst.msk [vmem:[%s341 + $0x10] sm:$0xff] %vm819, %v869
        %878 = vst.msk [vmem:[%s341 + $0x18] sm:$0xff] %vm819, %v872
        %s879 = sand.u32 %s226, 1
        %s880 = scalar_lea.sflag [#allocation4], %s879
        %s881 = sand.u32 %s226, 1
        %s882 = smul.addr %s881, 32
        %s883 = scalar_lea.vmem [#allocation5], %s882
        // Predicated region
        $region61: #{tpu_custom_call.1} parent=55 // pred_check
          %p884 = pneg %p236
        $region62: #{tpu_custom_call.1} parent=55 // pred_check_branch
          %886 = sbr.rel (%p884) target = $region64
        $region63: #{tpu_custom_call.1} parent=55 // pred_region
          %s887 = smul.u32 4, %s24
          %s889 = ssub.s32 512, 512
          %890 = vsyncadd %s880, %s889
          %s891 = smul.addr %s887, 128
          %s892 = scalar_lea.hbm %s9, %s891
          %s893 = sshll.u32 %s883, 4
          %s894 = int_to_ptr.vmem [resolvable:$true] %s893
          %899 = dma.vmem_to_hbm [thread:$0]  %s894, 512, %s892, %s880, 128, 128, 8
        $region64: #{tpu_custom_call.1} parent=55 // pred_fallthru
          _
      $region56: #{tpu_custom_call.1} parent=5 // pred_fallthru
        _
      %p900 = scmp.le.s32.totalorder 2, %s19
      // Predicated region
      $region65: #{tpu_custom_call.1} parent=5 // pred_check
        %p901 = pneg %p900
      $region66: #{tpu_custom_call.1} parent=5 // pred_check_branch
        %903 = sbr.rel (%p901) target = $region68
      $region67: #{tpu_custom_call.1} parent=5 // pred_region
        %s904 = ssub.s32 %s19, 2
        // Predicated region
        $region69: #{tpu_custom_call.1} parent=67 // pred_check
          %p905 = pneg %p242
        $region70: #{tpu_custom_call.1} parent=67 // pred_check_branch
          %907 = sbr.rel (%p905) target = $region72
        $region71: #{tpu_custom_call.1} parent=67 // pred_region
          %s908 = sand.u32 %s227, 1
          %s909 = scalar_lea.sflag [#allocation4], %s908
          %s910 = sand.u32 %s227, 1
          %s911 = smul.addr %s910, 32
          %s912 = scalar_lea.vmem [#allocation5], %s911
          %913 = dma.done %s909, 512
        $region72: #{tpu_custom_call.1} parent=67 // pred_fallthru
          _
      $region68: #{tpu_custom_call.1} parent=5 // pred_fallthru
        _
    $region6: #{tpu_custom_call.1} parent=1 // loop_footer
      %s23 = sadd.s32 1, %s19
    $region7: #{tpu_custom_call.1} parent=1 // loop_footer_branch
      %18 = sbr.rel target = $region3
    $region8: #{tpu_custom_call.1} parent=1 // loop_exit
      _
    %914 = vsyncpa [#allocation3], 1
    %s915 = scalar_lea.sflag [#allocation3], 1
    %916 = vsyncpa %s915, 1
    %917 = vsyncpa [#allocation4], 1
    %s918 = scalar_lea.sflag [#allocation4], 1
    %919 = vsyncpa %s918, 1

</llo_original>
